<compile_context>
chip_gen: v6e
topology: v6e:2x2x1
jax: 0.10.0
libtpu: 0.0.40
codegen_flags: <defaults>
</compile_context>

<pallas_src>
import functools

import jax
import jax.numpy as jnp
from jax.experimental import pallas as pl
from jax.experimental.pallas import tpu as pltpu


def _round_up(a: int, b: int) -> int:
    return (a + b - 1) // b * b


def _concat_pool_kernel(x_ref, o_ref, *, true_l, inv_l, need_mask):
    # x_ref: (TM, TL) chunk of rows.
    # o_ref: (1, 2, TM) lane-dense output block (row 0 = max, row 1 = avg),
    #        resident across the L grid axis (axis 1) -> used as accumulator.
    k = pl.program_id(1)
    tl = x_ref.shape[1]
    x = x_ref[...]

    if need_mask:
        col = jax.lax.broadcasted_iota(jnp.int32, x.shape, 1) + k * tl
        valid = col < true_l
        x_max_in = jnp.where(valid, x, -jnp.inf)                 # pad -> -inf
        x_sum_in = jnp.where(valid, x.astype(jnp.float32), 0.0)  # pad -> 0
    else:
        x_max_in = x
        x_sum_in = x.astype(jnp.float32)

    pmax = jnp.max(x_max_in, axis=-1).astype(jnp.float32)  # (TM,)
    psum = jnp.sum(x_sum_in, axis=-1)                       # (TM,) f32 accum

    @pl.when(k == 0)
    def _():
        o_ref[0, 0, :] = pmax
        o_ref[0, 1, :] = psum

    @pl.when(k > 0)
    def _():
        o_ref[0, 0, :] = jnp.maximum(o_ref[0, 0, :], pmax)
        o_ref[0, 1, :] = o_ref[0, 1, :] + psum

    @pl.when(k == pl.num_programs(1) - 1)
    def _():
        o_ref[0, 1, :] = o_ref[0, 1, :] * inv_l  # divide by the true L


def adaptive_concat_pool1d(x, *, block_bytes=4 * 1024 * 1024, max_rows=1024):
    """x: (N, C, L) -> (N, 2*C, 1), matching AdaptiveConcatPool1d(sz=None)."""
    # TODO(synk): only the default sz=1 (global pool) is implemented; sz>1
    # adaptive bins are not supported by this kernel.
    N, C, L = x.shape
    NR = N * C
    itemsize = x.dtype.itemsize

    # Pick the largest sublane-packed row tile that fits the per-block VMEM
    # budget; only tile L when even 8 rows at full L would not fit.
    rows_fit = block_bytes // max(1, L * itemsize)
    if rows_fit >= 8:
        tm = max(8, min(max_rows, (rows_fit // 8) * 8, _round_up(NR, 8)))
        tl = L
    else:
        tm = 8
        tl = max(128, (block_bytes // (tm * itemsize)) // 128 * 128)
        tl = min(tl, _round_up(L, 128))

    num_row_blocks = pl.cdiv(NR, tm)
    num_l_blocks = pl.cdiv(L, tl)
    need_mask = (L % tl) != 0

    kernel = functools.partial(
        _concat_pool_kernel, true_l=L, inv_l=1.0 / L, need_mask=need_mask)

    out = pl.pallas_call(
        kernel,
        out_shape=jax.ShapeDtypeStruct((num_row_blocks, 2, tm), jnp.float32),
        grid_spec=pltpu.PrefetchScalarGridSpec(
            num_scalar_prefetch=0,
            grid=(num_row_blocks, num_l_blocks),
            in_specs=[pl.BlockSpec((tm, tl), lambda i, k: (i, k))],
            out_specs=pl.BlockSpec((1, 2, tm), lambda i, k: (i, 0, 0)),
        ),
        compiler_params=pltpu.CompilerParams(
            dimension_semantics=("parallel", "arbitrary"),
            vmem_limit_bytes=32 * 1024 * 1024,
        ),
        cost_estimate=pl.CostEstimate(
            flops=2 * NR * L,
            transcendentals=0,
            bytes_accessed=NR * L * itemsize + num_row_blocks * tm * 2 * 4,
        ),
    )(x.reshape(NR, L))

    # (num_row_blocks, 2, TM) -> (2, NR): lane-dense kernel output back to the
    # PyTorch layout; tail rows (partial row block padding) are dropped.
    out = jnp.transpose(out, (1, 0, 2)).reshape(2, num_row_blocks * tm)[:, :NR]
    mx = out[0].reshape(N, C, 1)
    av = out[1].reshape(N, C, 1)
    return jnp.concatenate([mx, av], axis=1).astype(x.dtype)


def _reference(x):
    mx = jnp.max(x, axis=-1, keepdims=True)
    av = jnp.mean(x, axis=-1, keepdims=True)
    return jnp.concatenate([mx, av], axis=1)


if __name__ == "__main__":
    key = jax.random.PRNGKey(0)
    k1, k2 = jax.random.split(key)

    # Test 1: small shapes implied by the module forward (batch=2, C=4, L=16).
    x1 = jax.random.normal(k1, (2, 4, 16), dtype=jnp.float32)
    out1 = jax.block_until_ready(adaptive_concat_pool1d(x1))
    ref1 = _reference(x1)
    assert out1.shape == (2, 8, 1), out1.shape
    assert jnp.allclose(out1, ref1, atol=1e-5, rtol=1e-5), "mismatch (test 1)"

    # Test 2: force the L-tiled / masked / partial-row-block path by shrinking
    # the per-block byte budget (exercises the v7x-style reduction tiling).
    x2 = jax.random.normal(k2, (3, 5, 200), dtype=jnp.float32)
    out2 = jax.block_until_ready(adaptive_concat_pool1d(x2, block_bytes=4096))
    ref2 = _reference(x2)
    assert out2.shape == (3, 10, 1), out2.shape
    assert jnp.allclose(out2, ref2, atol=1e-5, rtol=1e-4), "mismatch (test 2)"

    print("KERNEL_OK")
</pallas_src>

<mosaic_0001>
module attributes {stable_mosaic.version = 11 : i64} {
  func.func @_concat_pool_kernel(%arg0: i32, %arg1: i32, %arg2: memref<8x16xf32, #tpu.memory_space<vmem>>, %arg3: memref<1x2x8xf32, #tpu.memory_space<vmem>>) attributes {dimension_semantics = [#tpu.dimension_semantics<parallel>, #tpu.dimension_semantics<arbitrary>], iteration_bounds = array<i64: 1, 1>, scalar_prefetch = 0 : i64, scratch_operands = 0 : i64, tpu.core_type = #tpu.core_type<tc>, window_params = [{transform_indices = @transform_0, window_bounds = array<i64: 8, 16>}, {transform_indices = @transform_1, window_bounds = array<i64: 1, 2, 8>}]} {
    %c0 = arith.constant 0 : index
    %c0_0 = arith.constant 0 : index
    %0 = vector.load %arg2[%c0, %c0_0] : memref<8x16xf32, #tpu.memory_space<vmem>>, vector<8x16xf32>
    %cst = arith.constant dense<0xFF800000> : vector<8xf32>
    %1 = vector.multi_reduction <maximumf>, %0, %cst [1] : vector<8x16xf32> to vector<8xf32>
    %cst_1 = arith.constant dense<0.000000e+00> : vector<8xf32>
    %2 = vector.multi_reduction <add>, %0, %cst_1 [1] : vector<8x16xf32> to vector<8xf32>
    %c0_i32 = arith.constant 0 : i32
    %3 = arith.cmpi eq, %arg1, %c0_i32 : i32
    %4 = arith.extui %3 : i1 to i32
    %c0_i32_2 = arith.constant 0 : i32
    %5 = arith.cmpi ne, %4, %c0_i32_2 : i32
    scf.if %5 {
      %c0_7 = arith.constant 0 : index
      %c0_8 = arith.constant 0 : index
      %c0_9 = arith.constant 0 : index
      %12 = vector.load %arg3[%c0_7, %c0_8, %c0_9] : memref<1x2x8xf32, #tpu.memory_space<vmem>>, vector<1x1x8xf32>
      %13 = vector.shape_cast %12 : vector<1x1x8xf32> to vector<8xf32>
      %14 = vector.shape_cast %1 : vector<8xf32> to vector<1x1x8xf32>
      tpu.vector_store %arg3[%c0_7, %c0_8, %c0_9], %14 {strides = array<i32>} : memref<1x2x8xf32, #tpu.memory_space<vmem>>, vector<1x1x8xf32>,
      %c0_10 = arith.constant 0 : index
      %c1 = arith.constant 1 : index
      %c0_11 = arith.constant 0 : index
      %15 = vector.load %arg3[%c0_10, %c1, %c0_11] : memref<1x2x8xf32, #tpu.memory_space<vmem>>, vector<1x1x8xf32>
      %16 = vector.shape_cast %15 : vector<1x1x8xf32> to vector<8xf32>
      %17 = vector.shape_cast %2 : vector<8xf32> to vector<1x1x8xf32>
      tpu.vector_store %arg3[%c0_10, %c1, %c0_11], %17 {strides = array<i32>} : memref<1x2x8xf32, #tpu.memory_space<vmem>>, vector<1x1x8xf32>,
    } else {
    }
    %c0_i32_3 = arith.constant 0 : i32
    %6 = arith.cmpi sgt, %arg1, %c0_i32_3 : i32
    %7 = arith.extui %6 : i1 to i32
    %c0_i32_4 = arith.constant 0 : i32
    %8 = arith.cmpi ne, %7, %c0_i32_4 : i32
    scf.if %8 {
      %c0_7 = arith.constant 0 : index
      %c0_8 = arith.constant 0 : index
      %c0_9 = arith.constant 0 : index
      %12 = vector.load %arg3[%c0_7, %c0_8, %c0_9] : memref<1x2x8xf32, #tpu.memory_space<vmem>>, vector<1x1x8xf32>
      %13 = vector.shape_cast %12 : vector<1x1x8xf32> to vector<8xf32>
      %14 = arith.maximumf %13, %1 : vector<8xf32>
      %c0_10 = arith.constant 0 : index
      %c0_11 = arith.constant 0 : index
      %c0_12 = arith.constant 0 : index
      %15 = vector.load %arg3[%c0_10, %c0_11, %c0_12] : memref<1x2x8xf32, #tpu.memory_space<vmem>>, vector<1x1x8xf32>
      %16 = vector.shape_cast %15 : vector<1x1x8xf32> to vector<8xf32>
      %17 = vector.shape_cast %14 : vector<8xf32> to vector<1x1x8xf32>
      tpu.vector_store %arg3[%c0_10, %c0_11, %c0_12], %17 {strides = array<i32>} : memref<1x2x8xf32, #tpu.memory_space<vmem>>, vector<1x1x8xf32>,
      %c0_13 = arith.constant 0 : index
      %c1 = arith.constant 1 : index
      %c0_14 = arith.constant 0 : index
      %18 = vector.load %arg3[%c0_13, %c1, %c0_14] : memref<1x2x8xf32, #tpu.memory_space<vmem>>, vector<1x1x8xf32>
      %19 = vector.shape_cast %18 : vector<1x1x8xf32> to vector<8xf32>
      %20 = arith.addf %19, %2 : vector<8xf32>
      %c0_15 = arith.constant 0 : index
      %c1_16 = arith.constant 1 : index
      %c0_17 = arith.constant 0 : index
      %21 = vector.load %arg3[%c0_15, %c1_16, %c0_17] : memref<1x2x8xf32, #tpu.memory_space<vmem>>, vector<1x1x8xf32>
      %22 = vector.shape_cast %21 : vector<1x1x8xf32> to vector<8xf32>
      %23 = vector.shape_cast %20 : vector<8xf32> to vector<1x1x8xf32>
      tpu.vector_store %arg3[%c0_15, %c1_16, %c0_17], %23 {strides = array<i32>} : memref<1x2x8xf32, #tpu.memory_space<vmem>>, vector<1x1x8xf32>,
    } else {
    }
    %c0_i32_5 = arith.constant 0 : i32
    %9 = arith.cmpi eq, %arg1, %c0_i32_5 : i32
    %10 = arith.extui %9 : i1 to i32
    %c0_i32_6 = arith.constant 0 : i32
    %11 = arith.cmpi ne, %10, %c0_i32_6 : i32
    scf.if %11 {
      %c0_7 = arith.constant 0 : index
      %c1 = arith.constant 1 : index
      %c0_8 = arith.constant 0 : index
      %12 = vector.load %arg3[%c0_7, %c1, %c0_8] : memref<1x2x8xf32, #tpu.memory_space<vmem>>, vector<1x1x8xf32>
      %13 = vector.shape_cast %12 : vector<1x1x8xf32> to vector<8xf32>
      %cst_9 = arith.constant 6.250000e-02 : f32
      %14 = vector.broadcast %cst_9 : f32 to vector<8xf32>
      %15 = arith.mulf %13, %14 : vector<8xf32>
      %c0_10 = arith.constant 0 : index
      %c1_11 = arith.constant 1 : index
      %c0_12 = arith.constant 0 : index
      %16 = vector.load %arg3[%c0_10, %c1_11, %c0_12] : memref<1x2x8xf32, #tpu.memory_space<vmem>>, vector<1x1x8xf32>
      %17 = vector.shape_cast %16 : vector<1x1x8xf32> to vector<8xf32>
      %18 = vector.shape_cast %15 : vector<8xf32> to vector<1x1x8xf32>
      tpu.vector_store %arg3[%c0_10, %c1_11, %c0_12], %18 {strides = array<i32>} : memref<1x2x8xf32, #tpu.memory_space<vmem>>, vector<1x1x8xf32>,
    } else {
    }
    return
  }
  func.func @transform_0(%arg0: i32, %arg1: i32) -> (i32, i32) {
    %c0_i32 = arith.constant 0 : i32
    return %arg0, %arg1 : i32, i32
  }
  func.func @transform_1(%arg0: i32, %arg1: i32) -> (i32, i32, i32) {
    %c0_i32 = arith.constant 0 : i32
    %c0_i32_0 = arith.constant 0 : i32
    %c0_i32_1 = arith.constant 0 : i32
    return %arg0, %c0_i32, %c0_i32_0 : i32, i32, i32
  }
}

</mosaic_0001>

<llo_original>
// kernel: tpu_custom_call.1
$region0: #{tpu_custom_call.1}
  #allocation0 [shape = 'u32[]', space=smem, size = 0x4, offset = 0x4, fixed_abs, tag = 'smem constant byte address 0x4 - core index']
  #allocation1 [shape = 'u32[144,128]{1,0:T(1,128)}', space=vmem, size = 0x12000, scoped, tag = 'internal scratch']
  %s0 = inlined_call_operand.hbm [shape: f32[8,16], index: 0, kind: input, shape index: {}]
  %s1 = inlined_call_operand.hbm [shape: f32[1,2,8], index: 1, kind: output, shape index: {}]
  %s2 = sld [smem:[#allocation0]]
  $region30: #{tpu_custom_call.1} parent=0
    _
  %s4 = ssub.s32 1, %s2
  %s5 = scalar_select 0, %s4, %s2
  $region1: #{tpu_custom_call.1} parent=0
    #allocation2 [shape = 'u8[4096]{0}', space=vmem, size = 0x1000, scoped, tag = 'input window, operand 0, single buffered']
    #allocation3 [shape = 's32[1]{0}', space=sflag, size = 0x4, scoped, tag = 'scoped memory for tpu_custom_call.1']
    #allocation4 [shape = 's32[1]{0}', space=sflag, size = 0x4, scoped, tag = 'scoped memory for tpu_custom_call.1']
    #allocation5 [shape = 'u8[1024]{0}', space=vmem, size = 0x400, scoped, tag = 'output window, operand 0, single buffered']
    %6 = vsyncpa [#allocation3], 0
    %7 = vsyncpa [#allocation4], 0
    // Predicated region
    $region2: #{tpu_custom_call.1} parent=1 // pred_check
      _
    $region3: #{tpu_custom_call.1} parent=1 // pred_check_branch
      %9 = sbr.rel (0) target = $region5
    $region4: #{tpu_custom_call.1} parent=1 // pred_region
      %s11 = ssub.s32 128, 128
      %12 = vsyncadd [#allocation3], %s11
      %s14 = sshll.u32 [#allocation2], 4
      %s15 = int_to_ptr.vmem [resolvable:$true] %s14
      %17 = dma.hbm_to_vmem [thread:$0]  %s0, 128, %s15, [#allocation3]
    $region5: #{tpu_custom_call.1} parent=1 // pred_fallthru
      _
    // Predicated region
    $region6: #{tpu_custom_call.1} parent=1 // pred_check
      _
    $region7: #{tpu_custom_call.1} parent=1 // pred_check_branch
      %19 = sbr.rel (0) target = $region9
    $region8: #{tpu_custom_call.1} parent=1 // pred_region
      %20 = dma.done [#allocation3], 128
    $region9: #{tpu_custom_call.1} parent=1 // pred_fallthru
      _
    %v21 = vld [vmem:[#allocation2] sm:$0xff]
    %vm22 = vcmask 130048
    %v23 = vsel %vm22, %v21, -inf
    %24 = vmax.xlane.f32.xlu0 %v23
    %v25 = vpop.xlane.xlu0 %24
    %v26 = vsel %vm22, %v21, 0.0
    %27 = vadd.xlane.f32.xlu0 %v26
    %v28 = vpop.xlane.xlu0 %27
    %p29 = scmp.eq.s32.totalorder 0, 0
    // Predicated region
    $region10: #{tpu_custom_call.1} parent=1 // pred_check
      %p30 = pneg %p29
    $region11: #{tpu_custom_call.1} parent=1 // pred_check_branch
      %32 = sbr.rel (%p30) target = $region13
    $region12: #{tpu_custom_call.1} parent=1 // pred_region
      %v34 = vlaneseq
      %v35 = vand.u32 %v34, 127
      %v36 = vlaneseq
      %v37 = vshrl.u32 %v36, 7
      %v38 = vsub.s32 %v35, %v37
      %v39 = vrot.slane %v25, %v38
      %vm41 = vcmask 57344
      %42 = vst.msk [vmem:[#allocation5] sm:$0x1] %vm41, %v39
      %v44 = vlaneseq
      %v45 = vshrl.u32 %v44, 7
      %v46 = vsub.s32 %v35, %v45
      %v47 = vrot.slane %v28, %v46
      %49 = vst.msk [vmem:[#allocation5 + $0x1] sm:$0x1] %vm41, %v47
    $region13: #{tpu_custom_call.1} parent=1 // pred_fallthru
      _
    %p50 = scmp.gt.s32.totalorder 0, 0
    // Predicated region
    $region14: #{tpu_custom_call.1} parent=1 // pred_check
      %p51 = pneg %p50
    $region15: #{tpu_custom_call.1} parent=1 // pred_check_branch
      %53 = sbr.rel (%p51) target = $region17
    $region16: #{tpu_custom_call.1} parent=1 // pred_region
      %v54 = vld [vmem:[#allocation5] sm:$0x1]
      %v56 = vlaneseq
      %v57 = vand.u32 %v56, 127
      %v58 = vlaneseq
      %v59 = vshrl.u32 %v58, 7
      %v60 = vsub.s32 %v57, %v59
      %v61 = vrot.slane %v25, %v60
      %v63 = vmax.f32 %v54, %v61
      %vm64 = vcmask 57344
      %65 = vst.msk [vmem:[#allocation5] sm:$0x1] %vm64, %v63
      %v66 = vld [vmem:[#allocation5 + $0x1] sm:$0x1]
      %v68 = vlaneseq
      %v69 = vshrl.u32 %v68, 7
      %v70 = vsub.s32 %v57, %v69
      %v71 = vrot.slane %v28, %v70
      %v73 = vadd.f32 %v66, %v71
      %74 = vst.msk [vmem:[#allocation5 + $0x1] sm:$0x1] %vm64, %v73
    $region17: #{tpu_custom_call.1} parent=1 // pred_fallthru
      _
    // Predicated region
    $region18: #{tpu_custom_call.1} parent=1 // pred_check
      %p75 = pneg %p29
    $region19: #{tpu_custom_call.1} parent=1 // pred_check_branch
      %77 = sbr.rel (%p75) target = $region21
    $region20: #{tpu_custom_call.1} parent=1 // pred_region
      %v78 = vld [vmem:[#allocation5 + $0x1] sm:$0x1]
      %v79 = vmul.f32 %v78, 0.0625
      %vm80 = vcmask 57344
      %81 = vst.msk [vmem:[#allocation5 + $0x1] sm:$0x1] %vm80, %v79
    $region21: #{tpu_custom_call.1} parent=1 // pred_fallthru
      _
    // Predicated region
    $region22: #{tpu_custom_call.1} parent=1 // pred_check
      _
    $region23: #{tpu_custom_call.1} parent=1 // pred_check_branch
      %83 = sbr.rel (0) target = $region25
    $region24: #{tpu_custom_call.1} parent=1 // pred_region
      %s85 = ssub.s32 32, 32
      %86 = vsyncadd [#allocation4], %s85
      %s88 = sshll.u32 [#allocation5], 4
      %s89 = int_to_ptr.vmem [resolvable:$true] %s88
      %91 = dma.vmem_to_hbm [thread:$0]  %s89, 32, %s1, [#allocation4]
    $region25: #{tpu_custom_call.1} parent=1 // pred_fallthru
      _
    // Predicated region
    $region26: #{tpu_custom_call.1} parent=1 // pred_check
      _
    $region27: #{tpu_custom_call.1} parent=1 // pred_check_branch
      %93 = sbr.rel (0) target = $region29
    $region28: #{tpu_custom_call.1} parent=1 // pred_region
      %94 = dma.done [#allocation4], 32
    $region29: #{tpu_custom_call.1} parent=1 // pred_fallthru
      _
    %95 = vsyncpa [#allocation3], 1
    %96 = vsyncpa [#allocation4], 1

</llo_original>
